<compile_context>
chip_gen: v7x
topology: tpu7x:2x2x1
jax: 0.10.0
libtpu: 0.0.40
codegen_flags: <defaults>
</compile_context>

<pallas_src>
import jax
import jax.numpy as jnp
from jax.experimental import pallas as pl
from jax.experimental.pallas import tpu as pltpu

LANE = 128                        # vreg lane width
_VMEM_BUDGET = 16 * 1024 * 1024   # double-buffered block-set budget (all gens)
_MAX_TILE_R = 2048                # v7x-friendly per-step row cap
_SUB_R = 128                      # rows per register-resident accumulation chunk


def _round_up(x, m):
    return ((x + m - 1) // m) * m


def _make_kernel(C, tile_r, sub_r, HW, ragged, dens_dtype):
    """Kernel closure over static shape parameters."""

    def kernel(x_ref, w_ref, b_ref, dens_ref, inst_ref, cnt_ref):
        # x_ref:    (1, C, tile_r, 128) VMEM  features tile (native dtype)
        # w_ref:    (C,)                SMEM  1x1-conv weight (f32)
        # b_ref:    (1,)                SMEM  bias (f32)
        # dens_ref: (1, tile_r, 128)    VMEM  density tile
        # inst_ref: (1, tile_r, 128)    VMEM  binarized tile (int8)
        # cnt_ref:  (1, 1, 128)         VMEM  per-tile per-lane partial count
        b = b_ref[0]
        t = pl.program_id(1)
        cnt = jnp.zeros((1, LANE), jnp.float32)

        n_chunks = pl.cdiv(tile_r, sub_r)
        for ci in range(n_chunks):               # static unroll, static slices
            r0 = ci * sub_r
            rows = min(sub_r, tile_r - r0)

            # 1x1 conv == channel reduction on the VPU; f32 accumulation stays
            # in vregs (rows <= 128 -> <=16 vregs).
            first = x_ref[0, 0, r0:r0 + rows, :].astype(jnp.float32) * w_ref[0]
            if C <= 32:
                acc = first
                for c in range(1, C):            # static unroll for small C
                    acc = acc + x_ref[0, c, r0:r0 + rows, :].astype(jnp.float32) * w_ref[c]
            else:
                def body(c, a):
                    return a + x_ref[0, c, r0:r0 + rows, :].astype(jnp.float32) * w_ref[c]
                acc = jax.lax.fori_loop(1, C, body, first)

            logits = acc + b
            density = jax.nn.sigmoid(logits)     # f32 (rows, 128)
            dens_ref[0, r0:r0 + rows, :] = density.astype(dens_dtype)
            # sigmoid(x) > 0.5  <=>  x > 0 (exact); int8 cuts writeback 4x.
            inst_ref[0, r0:r0 + rows, :] = (logits > 0.0).astype(jnp.int8)

            if ragged:
                # Mask padded lanes / clamped out-of-bounds rows out of count.
                gidx = ((t * tile_r + r0) * LANE
                        + jax.lax.broadcasted_iota(jnp.int32, (rows, LANE), 0) * LANE
                        + jax.lax.broadcasted_iota(jnp.int32, (rows, LANE), 1))
                density = jnp.where(gidx < HW, density, 0.0)
            cnt = cnt + jnp.sum(density, axis=0, keepdims=True)

        cnt_ref[0] = cnt                         # lane-dense unmasked store

    return kernel


def crowd_head(features, weight, bias, *, density_dtype=jnp.float32):
    """features: (N, C, H, W) NCHW (f32 or bf16).  weight: (1, C, 1, 1).  bias: (1,)."""
    N, C, H, W = features.shape
    HW = H * W
    R = pl.cdiv(HW, LANE)                        # number of 128-wide spatial rows

    in_bytes = jnp.dtype(features.dtype).itemsize
    dens_bytes = jnp.dtype(density_dtype).itemsize
    bytes_per_row = (C * in_bytes + dens_bytes + 1) * LANE

    # Tile sizing: biggest row-tile that keeps the double-buffered block set
    # under budget, capped for per-step-overhead amortization on v7x.
    tile_r = _VMEM_BUDGET // (2 * bytes_per_row)
    tile_r = max(32, min(_MAX_TILE_R, tile_r))
    tile_r -= tile_r % 32                        # native int8 output tiling
    if R <= tile_r:
        tile_r = R                               # full-extent block (always legal)
    if N * pl.cdiv(R, tile_r) < 2 and R > 32:
        tile_r = _round_up(pl.cdiv(R, 2), 32)    # feed both v7x TensorCores
    n_tiles = pl.cdiv(R, tile_r)

    HW_pad = R * LANE
    ragged = (HW_pad != HW) or (R % tile_r != 0)

    # Keep the native feature dtype; only pad when H*W is not 128-aligned.
    x = features.reshape(N, C, HW)
    if HW_pad != HW:
        # TODO(synk): a zero-copy aligned-main-region + tail split would avoid
        # this extra HBM pass; only taken for non-128-aligned H*W.
        x = jnp.pad(x, ((0, 0), (0, 0), (0, HW_pad - HW)))
    x = x.reshape(N, C, R, LANE)

    w = weight.reshape(C).astype(jnp.float32)
    b = bias.reshape(1).astype(jnp.float32)

    block_bytes = bytes_per_row * tile_r + 4 * LANE
    vmem_limit = int(min(48 << 20, max(16 << 20, 2 * block_bytes + (4 << 20))))

    sub_r = _SUB_R if tile_r > _SUB_R else tile_r
    kernel = _make_kernel(C, tile_r, sub_r, HW, ragged, density_dtype)

    dens, inst, counts = pl.pallas_call(
        kernel,
        out_shape=(
            jax.ShapeDtypeStruct((N, R, LANE), density_dtype),
            jax.ShapeDtypeStruct((N, R, LANE), jnp.int8),
            jax.ShapeDtypeStruct((N, n_tiles, LANE), jnp.float32),
        ),
        grid_spec=pltpu.PrefetchScalarGridSpec(
            num_scalar_prefetch=0,
            grid=(N, n_tiles),
            in_specs=[
                pl.BlockSpec((1, C, tile_r, LANE), lambda n, t: (n, 0, t, 0)),
                pl.BlockSpec(memory_space=pltpu.MemorySpace.SMEM),   # weight
                pl.BlockSpec(memory_space=pltpu.MemorySpace.SMEM),   # bias
            ],
            out_specs=[
                pl.BlockSpec((1, tile_r, LANE), lambda n, t: (n, t, 0)),
                pl.BlockSpec((1, tile_r, LANE), lambda n, t: (n, t, 0)),
                pl.BlockSpec((1, 1, LANE), lambda n, t: (n, t, 0)),
            ],
        ),
        compiler_params=pltpu.CompilerParams(
            dimension_semantics=("parallel", "parallel"),
            vmem_limit_bytes=vmem_limit,
        ),
    )(x, w, b)

    if HW_pad == HW:                             # zero-copy reshapes
        density_map = dens.reshape(N, 1, H, W)
        instance_map = inst.reshape(N, 1, H, W)
    else:
        density_map = dens.reshape(N, HW_pad)[:, :HW].reshape(N, 1, H, W)
        instance_map = inst.reshape(N, HW_pad)[:, :HW].reshape(N, 1, H, W)
    count = counts.sum(axis=(1, 2))
    return {
        "density_map": density_map,
        "instance_map": instance_map,   # int8 0/1 (cast downstream if needed)
        "count": count,
    }


if __name__ == "__main__":
    key = jax.random.PRNGKey(0)
    k_feat, k_w, k_b = jax.random.split(key, 3)

    N, C, H, W = 2, 4, 16, 16
    features = jax.random.normal(k_feat, (N, C, H, W), dtype=jnp.float32)
    weight = jax.random.normal(k_w, (1, C, 1, 1), dtype=jnp.float32) * 0.1
    bias = jax.random.normal(k_b, (1,), dtype=jnp.float32) * 0.1

    def reference(feats):
        logits = jnp.einsum("nchw,c->nhw", feats.astype(jnp.float32),
                            weight.reshape(C),
                            precision=jax.lax.Precision.HIGHEST) + bias[0]
        dens = jax.nn.sigmoid(logits)[:, None]
        inst = (dens > 0.5).astype(jnp.float32)
        return dens, inst, dens.sum(axis=(1, 2, 3))

    # f32 features, 128-aligned spatial extent.
    out = crowd_head(features, weight, bias)
    jax.block_until_ready(out)
    d_ref, i_ref, c_ref = reference(features)
    assert out["density_map"].shape == (N, 1, H, W)
    assert out["instance_map"].shape == (N, 1, H, W)
    assert out["count"].shape == (N,)
    assert jnp.allclose(out["density_map"], d_ref, atol=1e-5)
    assert jnp.allclose(out["instance_map"].astype(jnp.float32), i_ref)
    assert jnp.allclose(out["count"], c_ref, atol=1e-3)

    # bf16 features exercise the native-dtype (halved HBM read) path.
    out_bf = crowd_head(features.astype(jnp.bfloat16), weight, bias)
    jax.block_until_ready(out_bf)
    d_bf, _, c_bf = reference(features.astype(jnp.bfloat16))
    assert jnp.allclose(out_bf["density_map"], d_bf, atol=1e-4)
    assert jnp.allclose(out_bf["count"], c_bf, atol=1e-2)

    # Non-128-aligned spatial extent exercises the pad + masked-count path.
    H2 = W2 = 12
    feats2 = jax.random.normal(k_feat, (N, C, H2, W2), dtype=jnp.float32)
    out2 = crowd_head(feats2, weight, bias)
    jax.block_until_ready(out2)
    logits2 = jnp.einsum("nchw,c->nhw", feats2, weight.reshape(C),
                         precision=jax.lax.Precision.HIGHEST) + bias[0]
    d2 = jax.nn.sigmoid(logits2)[:, None]
    assert out2["density_map"].shape == (N, 1, H2, W2)
    assert jnp.allclose(out2["density_map"], d2, atol=1e-5)
    assert jnp.allclose(out2["count"], d2.sum(axis=(1, 2, 3)), atol=1e-3)

    print("KERNEL_OK")
</pallas_src>

<mosaic_0001>
module attributes {stable_mosaic.version = 11 : i64} {
  func.func @kernel(%arg0: i32, %arg1: i32, %arg2: memref<1x4x2x128xf32, #tpu.memory_space<vmem>>, %arg3: memref<4xf32, #tpu.memory_space<smem>>, %arg4: memref<1xf32, #tpu.memory_space<smem>>, %arg5: memref<1x2x128xf32, #tpu.memory_space<vmem>>, %arg6: memref<1x2x128xi8, #tpu.memory_space<vmem>>, %arg7: memref<1x1x128xf32, #tpu.memory_space<vmem>>) attributes {dimension_semantics = [#tpu.dimension_semantics<parallel>, #tpu.dimension_semantics<parallel>], iteration_bounds = array<i64: 2, 1>, scalar_prefetch = 0 : i64, scratch_operands = 0 : i64, tpu.core_type = #tpu.core_type<tc>, window_params = [{transform_indices = @transform_0, window_bounds = array<i64: 1, 4, 2, 128>}, {transform_indices = @transform_1, window_bounds = array<i64: 4>}, {transform_indices = @transform_2, window_bounds = array<i64: 1>}, {transform_indices = @transform_3, window_bounds = array<i64: 1, 2, 128>}, {transform_indices = @transform_4, window_bounds = array<i64: 1, 2, 128>}, {transform_indices = @transform_5, window_bounds = array<i64: 1, 1, 128>}]} {
    %c0 = arith.constant 0 : index
    %0 = memref.load %arg4[%c0] : memref<1xf32, #tpu.memory_space<smem>>
    %cst = arith.constant 0.000000e+00 : f32
    %1 = vector.broadcast %cst : f32 to vector<1x128xf32>
    %c0_0 = arith.constant 0 : index
    %c0_1 = arith.constant 0 : index
    %c0_2 = arith.constant 0 : index
    %c0_3 = arith.constant 0 : index
    %2 = vector.load %arg2[%c0_0, %c0_1, %c0_2, %c0_3] : memref<1x4x2x128xf32, #tpu.memory_space<vmem>>, vector<1x1x2x128xf32>
    %3 = vector.shape_cast %2 : vector<1x1x2x128xf32> to vector<2x128xf32>
    %c0_4 = arith.constant 0 : index
    %4 = memref.load %arg3[%c0_4] : memref<4xf32, #tpu.memory_space<smem>>
    %5 = vector.broadcast %4 : f32 to vector<2x128xf32>
    %6 = arith.mulf %3, %5 : vector<2x128xf32>
    %c0_5 = arith.constant 0 : index
    %c1 = arith.constant 1 : index
    %c0_6 = arith.constant 0 : index
    %c0_7 = arith.constant 0 : index
    %7 = vector.load %arg2[%c0_5, %c1, %c0_6, %c0_7] : memref<1x4x2x128xf32, #tpu.memory_space<vmem>>, vector<1x1x2x128xf32>
    %8 = vector.shape_cast %7 : vector<1x1x2x128xf32> to vector<2x128xf32>
    %c1_8 = arith.constant 1 : index
    %9 = memref.load %arg3[%c1_8] : memref<4xf32, #tpu.memory_space<smem>>
    %10 = vector.broadcast %9 : f32 to vector<2x128xf32>
    %11 = arith.mulf %8, %10 : vector<2x128xf32>
    %12 = arith.addf %6, %11 : vector<2x128xf32>
    %c0_9 = arith.constant 0 : index
    %c2 = arith.constant 2 : index
    %c0_10 = arith.constant 0 : index
    %c0_11 = arith.constant 0 : index
    %13 = vector.load %arg2[%c0_9, %c2, %c0_10, %c0_11] : memref<1x4x2x128xf32, #tpu.memory_space<vmem>>, vector<1x1x2x128xf32>
    %14 = vector.shape_cast %13 : vector<1x1x2x128xf32> to vector<2x128xf32>
    %c2_12 = arith.constant 2 : index
    %15 = memref.load %arg3[%c2_12] : memref<4xf32, #tpu.memory_space<smem>>
    %16 = vector.broadcast %15 : f32 to vector<2x128xf32>
    %17 = arith.mulf %14, %16 : vector<2x128xf32>
    %18 = arith.addf %12, %17 : vector<2x128xf32>
    %c0_13 = arith.constant 0 : index
    %c3 = arith.constant 3 : index
    %c0_14 = arith.constant 0 : index
    %c0_15 = arith.constant 0 : index
    %19 = vector.load %arg2[%c0_13, %c3, %c0_14, %c0_15] : memref<1x4x2x128xf32, #tpu.memory_space<vmem>>, vector<1x1x2x128xf32>
    %20 = vector.shape_cast %19 : vector<1x1x2x128xf32> to vector<2x128xf32>
    %c3_16 = arith.constant 3 : index
    %21 = memref.load %arg3[%c3_16] : memref<4xf32, #tpu.memory_space<smem>>
    %22 = vector.broadcast %21 : f32 to vector<2x128xf32>
    %23 = arith.mulf %20, %22 : vector<2x128xf32>
    %24 = arith.addf %18, %23 : vector<2x128xf32>
    %25 = vector.broadcast %0 : f32 to vector<2x128xf32>
    %26 = arith.addf %24, %25 : vector<2x128xf32>
    %27 = arith.negf %26 : vector<2x128xf32>
    %28 = math.exp %27 : vector<2x128xf32>
    %cst_17 = arith.constant 1.000000e+00 : f32
    %29 = vector.broadcast %cst_17 : f32 to vector<2x128xf32>
    %30 = arith.addf %29, %28 : vector<2x128xf32>
    %31 = arith.divf %29, %30 : vector<2x128xf32>
    %c0_18 = arith.constant 0 : index
    %c0_19 = arith.constant 0 : index
    %c0_20 = arith.constant 0 : index
    %32 = vector.load %arg5[%c0_18, %c0_19, %c0_20] : memref<1x2x128xf32, #tpu.memory_space<vmem>>, vector<1x2x128xf32>
    %33 = vector.shape_cast %32 : vector<1x2x128xf32> to vector<2x128xf32>
    %34 = vector.shape_cast %31 : vector<2x128xf32> to vector<1x2x128xf32>
    tpu.vector_store %arg5[%c0_18, %c0_19, %c0_20], %34 {strides = array<i32>} : memref<1x2x128xf32, #tpu.memory_space<vmem>>, vector<1x2x128xf32>,
    %cst_21 = arith.constant 0.000000e+00 : f32
    %35 = vector.broadcast %cst_21 : f32 to vector<2x128xf32>
    %36 = arith.cmpf ogt, %26, %35 : vector<2x128xf32>
    %37 = arith.extui %36 : vector<2x128xi1> to vector<2x128xi8>
    %c0_22 = arith.constant 0 : index
    %c0_23 = arith.constant 0 : index
    %c0_24 = arith.constant 0 : index
    %38 = vector.load %arg6[%c0_22, %c0_23, %c0_24] : memref<1x2x128xi8, #tpu.memory_space<vmem>>, vector<1x2x128xi8>
    %39 = vector.shape_cast %38 : vector<1x2x128xi8> to vector<2x128xi8>
    %40 = vector.shape_cast %37 : vector<2x128xi8> to vector<1x2x128xi8>
    tpu.vector_store %arg6[%c0_22, %c0_23, %c0_24], %40 {strides = array<i32>} : memref<1x2x128xi8, #tpu.memory_space<vmem>>, vector<1x2x128xi8>,
    %cst_25 = arith.constant dense<0.000000e+00> : vector<128xf32>
    %41 = vector.multi_reduction <add>, %31, %cst_25 [0] : vector<2x128xf32> to vector<128xf32>
    %42 = vector.shape_cast %41 : vector<128xf32> to vector<1x128xf32>
    %43 = arith.addf %1, %42 : vector<1x128xf32>
    %c0_26 = arith.constant 0 : index
    %c0_27 = arith.constant 0 : index
    %c0_28 = arith.constant 0 : index
    %44 = vector.load %arg7[%c0_26, %c0_27, %c0_28] : memref<1x1x128xf32, #tpu.memory_space<vmem>>, vector<1x1x128xf32>
    %45 = vector.shape_cast %44 : vector<1x1x128xf32> to vector<1x128xf32>
    %46 = vector.shape_cast %43 : vector<1x128xf32> to vector<1x1x128xf32>
    tpu.vector_store %arg7[%c0_26, %c0_27, %c0_28], %46 {strides = array<i32>} : memref<1x1x128xf32, #tpu.memory_space<vmem>>, vector<1x1x128xf32>,
    return
  }
  func.func @transform_0(%arg0: i32, %arg1: i32) -> (i32, i32, i32, i32) {
    %c0_i32 = arith.constant 0 : i32
    %c0_i32_0 = arith.constant 0 : i32
    %c0_i32_1 = arith.constant 0 : i32
    return %arg0, %c0_i32, %arg1, %c0_i32_0 : i32, i32, i32, i32
  }
  func.func @transform_1(%arg0: i32, %arg1: i32) -> i32 {
    %c0_i32 = arith.constant 0 : i32
    %c0_i32_0 = arith.constant 0 : i32
    return %c0_i32 : i32
  }
  func.func @transform_2(%arg0: i32, %arg1: i32) -> i32 {
    %c0_i32 = arith.constant 0 : i32
    %c0_i32_0 = arith.constant 0 : i32
    return %c0_i32 : i32
  }
  func.func @transform_3(%arg0: i32, %arg1: i32) -> (i32, i32, i32) {
    %c0_i32 = arith.constant 0 : i32
    %c0_i32_0 = arith.constant 0 : i32
    return %arg0, %arg1, %c0_i32 : i32, i32, i32
  }
  func.func @transform_4(%arg0: i32, %arg1: i32) -> (i32, i32, i32) {
    %c0_i32 = arith.constant 0 : i32
    %c0_i32_0 = arith.constant 0 : i32
    return %arg0, %arg1, %c0_i32 : i32, i32, i32
  }
  func.func @transform_5(%arg0: i32, %arg1: i32) -> (i32, i32, i32) {
    %c0_i32 = arith.constant 0 : i32
    %c0_i32_0 = arith.constant 0 : i32
    return %arg0, %arg1, %c0_i32 : i32, i32, i32
  }
}

</mosaic_0001>

<llo_original>
// kernel: tpu_custom_call.1
$region0: #{tpu_custom_call.1}
  #allocation0 [shape = 'u32[]', space=smem, size = 0x4, offset = 0x4, fixed_abs, tag = 'smem constant byte address 0x4 - core index']
  #allocation1 [shape = 'u32[144,128]{1,0:T(1,128)}', space=vmem, size = 0x12000, scoped, tag = 'internal scratch']
  #allocation2 [shape = 'f32[1]{0:T(128)S(6)}', space=smem, size = 0x200, scoped, tag = 'scoped memory for tpu_custom_call.1']
  %s0 = inlined_call_operand.hbm [shape: f32[2,4,2,128], index: 0, kind: input, shape index: {}]
  %s1 = inlined_call_operand.vmem [shape: f32[4], index: 1, kind: input, shape index: {}]
  %s2 = inlined_call_operand.<no memory space> [shape: f32[1], index: 2, kind: input, shape index: {}]
  %s3 = inlined_call_operand.hbm [shape: f32[2,2,128], index: 3, kind: output, shape index: {0}]
  %s4 = inlined_call_operand.hbm [shape: s8[2,2,128], index: 4, kind: output, shape index: {1}]
  %s5 = inlined_call_operand.hbm [shape: f32[2,1,128], index: 5, kind: output, shape index: {2}]
  %6 = xla_tuple %s3, %s4, %s5
  %s7 = sld [smem:[#allocation0]]
  $region69: #{tpu_custom_call.1} parent=0
    _
  %s9 = ssub.s32 1, %s7
  %s10 = scalar_select 0, %s9, %s7
  %11 = sst [smem:[#allocation2]] %s2
  $region1: #{tpu_custom_call.1} parent=0
    #allocation3 [shape = 'u8[8192]{0}', space=vmem, size = 0x2000, scoped, tag = 'input window, operand 0']
    #allocation4 [shape = 's32[2]{0}', space=sflag, size = 0x8, scoped, tag = 'scoped memory for tpu_custom_call.1']
    #allocation5 [shape = 's32[2]{0}', space=sflag, size = 0x8, scoped, tag = 'scoped memory for tpu_custom_call.1']
    #allocation6 [shape = 's32[2]{0}', space=sflag, size = 0x8, scoped, tag = 'scoped memory for tpu_custom_call.1']
    #allocation7 [shape = 'u8[512]{0}', space=smem, size = 0x200, scoped, tag = 'input window, operand 1, single buffered']
    #allocation8 [shape = 'u8[2048]{0}', space=vmem, size = 0x800, scoped, tag = 'output window, operand 0']
    #allocation9 [shape = 'u8[1024]{0}', space=vmem, size = 0x400, scoped, tag = 'output window, operand 1']
    #allocation10 [shape = 's32[2]{0}', space=sflag, size = 0x8, scoped, tag = 'scoped memory for tpu_custom_call.1']
    #allocation11 [shape = 'u8[1024]{0}', space=vmem, size = 0x400, scoped, tag = 'output window, operand 2']
    %12 = vsyncpa [#allocation4], 0
    %s13 = scalar_lea.sflag [#allocation4], 1
    %14 = vsyncpa %s13, 0
    %15 = vsyncpa [#allocation6], 0
    %16 = vsyncpa [#allocation5], 0
    %s17 = scalar_lea.sflag [#allocation5], 1
    %18 = vsyncpa %s17, 0
    %19 = vsyncpa [#allocation10], 0
    %s20 = scalar_lea.sflag [#allocation10], 1
    %21 = vsyncpa %s20, 0
    loop: start=0, step=1, limit=4
    $region2: #{tpu_custom_call.1} parent=1 // loop_pre_header
      _
    $region3: #{tpu_custom_call.1} parent=1 // loop_header
      %s23 = sphi 0, %s27
      %p24 = scmp.ge.s32.totalorder %s23, 4
      %s30 = sphi 0, %s42
      %s31 = sphi 0, %s38
      %s32 = sphi 0, %s30
      %s33 = sphi 0, %s31
      %s34 = sphi 0, %s32
      %s35 = sphi 0, %s33
      %s47 = sphi 0, %s49
      %s50 = sphi 0, %s47
      %s51 = sphi 0, %s50
      %s67 = sphi 0, %s51
      %s71 = sphi 0, %s71
      %s73 = sphi 0, %s71
      %s74 = sphi 0, %s73
      %s88 = sphi 0, %s74
      %s92 = sphi 0, %s92
      %s94 = sphi 0, %s92
      %s95 = sphi 0, %s94
      %s109 = sphi 0, %s95
      %s117 = sphi 0, %s119
      %s120 = sphi 0, %s117
      %s121 = sphi 0, %s120
      %s137 = sphi 0, %s121
      %s145 = sphi 0, %s147
      %s148 = sphi 0, %s145
      %s149 = sphi 0, %s148
      %s165 = sphi 0, %s149
      %s173 = sphi 0, %s175
      %s176 = sphi 0, %s173
      %s177 = sphi 0, %s176
      %s193 = sphi 0, %s177
    $region4: #{tpu_custom_call.1} parent=1 // loop_header_branch
      %26 = sbr.rel (%p24) target = $region8
    $region5: #{tpu_custom_call.1} parent=1 // loop_body
      %s28 = ssub.s32 %s23, 1
      %s29 = ssub.s32 %s23, 2
      %s36 = sadd.s32 1, %s31
      %p37 = scmp.ge.s32.totalorder %s36, 1
      %s38 = scalar_select %p37, 0, %s36
      %s39 = sadd.s32 1, %s30
      %s40 = scalar_select %p37, %s39, %s30
      %p41 = scmp.ge.s32.totalorder %s40, 2
      %s42 = scalar_select %p41, 0, %s40
      %s43 = ssub.s32 %s30, %s42
      %s44 = ssub.s32 %s31, %s38
      %s45 = sor.u32 %s43, %s44
      %p46 = scmp.eq.s32.totalorder %s45, 0
      %s48 = sadd.s32 %s47, 1
      %s49 = scalar_select %p46, %s47, %s48
      %p52 = pneg %p46
      %p53 = scmp.eq.s32.totalorder %s23, 1
      %p54 = por %p52, %p53
      %p55 = scmp.ne.s32.totalorder %s47, %s50
      %p56 = scmp.eq.s32.totalorder %s23, 0
      %p57 = por %p55, %p56
      %p58 = scmp.ne.s32.totalorder %s47, %s50
      %p59 = scmp.eq.s32.totalorder %s28, 1
      %p60 = por %p58, %p59
      %p61 = scmp.ne.s32.totalorder %s50, %s51
      %p62 = scmp.eq.s32.totalorder %s28, 0
      %p63 = por %p61, %p62
      %p64 = scmp.ne.s32.totalorder %s50, %s51
      %p65 = scmp.eq.s32.totalorder %s29, 1
      %p66 = por %p64, %p65
      %p68 = scmp.ne.s32.totalorder %s51, %s67
      %p69 = scmp.eq.s32.totalorder %s29, 0
      %p70 = por %p68, %p69
      %s72 = sadd.s32 %s71, 1
      %p75 = scmp.eq.s32.totalorder %s23, 1
      %p76 = scmp.ne.s32.totalorder %s71, %s73
      %p77 = scmp.eq.s32.totalorder %s23, 0
      %p78 = por %p76, %p77
      %p79 = scmp.ne.s32.totalorder %s71, %s73
      %p80 = scmp.eq.s32.totalorder %s28, 1
      %p81 = por %p79, %p80
      %p82 = scmp.ne.s32.totalorder %s73, %s74
      %p83 = scmp.eq.s32.totalorder %s28, 0
      %p84 = por %p82, %p83
      %p85 = scmp.ne.s32.totalorder %s73, %s74
      %p86 = scmp.eq.s32.totalorder %s29, 1
      %p87 = por %p85, %p86
      %p89 = scmp.ne.s32.totalorder %s74, %s88
      %p90 = scmp.eq.s32.totalorder %s29, 0
      %p91 = por %p89, %p90
      %s93 = sadd.s32 %s92, 1
      %p96 = scmp.eq.s32.totalorder %s23, 1
      %p97 = scmp.ne.s32.totalorder %s92, %s94
      %p98 = scmp.eq.s32.totalorder %s23, 0
      %p99 = por %p97, %p98
      %p100 = scmp.ne.s32.totalorder %s92, %s94
      %p101 = scmp.eq.s32.totalorder %s28, 1
      %p102 = por %p100, %p101
      %p103 = scmp.ne.s32.totalorder %s94, %s95
      %p104 = scmp.eq.s32.totalorder %s28, 0
      %p105 = por %p103, %p104
      %p106 = scmp.ne.s32.totalorder %s94, %s95
      %p107 = scmp.eq.s32.totalorder %s29, 1
      %p108 = por %p106, %p107
      %p110 = scmp.ne.s32.totalorder %s95, %s109
      %p111 = scmp.eq.s32.totalorder %s29, 0
      %p112 = por %p110, %p111
      %s113 = ssub.s32 %s30, %s42
      %s114 = ssub.s32 %s31, %s38
      %s115 = sor.u32 %s113, %s114
      %p116 = scmp.eq.s32.totalorder %s115, 0
      %s118 = sadd.s32 %s117, 1
      %s119 = scalar_select %p116, %s117, %s118
      %p122 = pneg %p116
      %p123 = scmp.eq.s32.totalorder %s23, 1
      %p124 = por %p122, %p123
      %p125 = scmp.ne.s32.totalorder %s117, %s120
      %p126 = scmp.eq.s32.totalorder %s23, 0
      %p127 = por %p125, %p126
      %p128 = scmp.ne.s32.totalorder %s117, %s120
      %p129 = scmp.eq.s32.totalorder %s28, 1
      %p130 = por %p128, %p129
      %p131 = scmp.ne.s32.totalorder %s120, %s121
      %p132 = scmp.eq.s32.totalorder %s28, 0
      %p133 = por %p131, %p132
      %p134 = scmp.ne.s32.totalorder %s120, %s121
      %p135 = scmp.eq.s32.totalorder %s29, 1
      %p136 = por %p134, %p135
      %p138 = scmp.ne.s32.totalorder %s121, %s137
      %p139 = scmp.eq.s32.totalorder %s29, 0
      %p140 = por %p138, %p139
      %s141 = ssub.s32 %s30, %s42
      %s142 = ssub.s32 %s31, %s38
      %s143 = sor.u32 %s141, %s142
      %p144 = scmp.eq.s32.totalorder %s143, 0
      %s146 = sadd.s32 %s145, 1
      %s147 = scalar_select %p144, %s145, %s146
      %p150 = pneg %p144
      %p151 = scmp.eq.s32.totalorder %s23, 1
      %p152 = por %p150, %p151
      %p153 = scmp.ne.s32.totalorder %s145, %s148
      %p154 = scmp.eq.s32.totalorder %s23, 0
      %p155 = por %p153, %p154
      %p156 = scmp.ne.s32.totalorder %s145, %s148
      %p157 = scmp.eq.s32.totalorder %s28, 1
      %p158 = por %p156, %p157
      %p159 = scmp.ne.s32.totalorder %s148, %s149
      %p160 = scmp.eq.s32.totalorder %s28, 0
      %p161 = por %p159, %p160
      %p162 = scmp.ne.s32.totalorder %s148, %s149
      %p163 = scmp.eq.s32.totalorder %s29, 1
      %p164 = por %p162, %p163
      %p166 = scmp.ne.s32.totalorder %s149, %s165
      %p167 = scmp.eq.s32.totalorder %s29, 0
      %p168 = por %p166, %p167
      %s169 = ssub.s32 %s30, %s42
      %s170 = ssub.s32 %s31, %s38
      %s171 = sor.u32 %s169, %s170
      %p172 = scmp.eq.s32.totalorder %s171, 0
      %s174 = sadd.s32 %s173, 1
      %s175 = scalar_select %p172, %s173, %s174
      %p178 = pneg %p172
      %p179 = scmp.eq.s32.totalorder %s23, 1
      %p180 = por %p178, %p179
      %p181 = scmp.ne.s32.totalorder %s173, %s176
      %p182 = scmp.eq.s32.totalorder %s23, 0
      %p183 = por %p181, %p182
      %p184 = scmp.ne.s32.totalorder %s173, %s176
      %p185 = scmp.eq.s32.totalorder %s28, 1
      %p186 = por %p184, %p185
      %p187 = scmp.ne.s32.totalorder %s176, %s177
      %p188 = scmp.eq.s32.totalorder %s28, 0
      %p189 = por %p187, %p188
      %p190 = scmp.ne.s32.totalorder %s176, %s177
      %p191 = scmp.eq.s32.totalorder %s29, 1
      %p192 = por %p190, %p191
      %p194 = scmp.ne.s32.totalorder %s177, %s193
      %p195 = scmp.eq.s32.totalorder %s29, 0
      %p196 = por %p194, %p195
      %p197 = scmp.le.s32.totalorder 1, %s23
      %p198 = scmp.lt.s32.totalorder %s23, 3
      %p199 = pnand %p197, %p198
      %p200 = pneg %p199
      // Predicated region
      $region9: #{tpu_custom_call.1} parent=5 // pred_check
        _
      $region10: #{tpu_custom_call.1} parent=5 // pred_check_branch
        %202 = sbr.rel (%p199) target = $region12
      $region11: #{tpu_custom_call.1} parent=5 // pred_region
        %s203 = ssub.s32 %s23, 1
        // Predicated region
        $region13: #{tpu_custom_call.1} parent=11 // pred_check
          %p204 = pneg %p84
        $region14: #{tpu_custom_call.1} parent=11 // pred_check_branch
          %206 = sbr.rel (%p204) target = $region16
        $region15: #{tpu_custom_call.1} parent=11 // pred_region
          %s208 = ssub.s32 16, 16
          %209 = vsyncadd [#allocation6], %s208
          %s211 = sshll.u32 %s1, 4
          %s212 = int_to_ptr.vmem [resolvable:$true] %s211
          %214 = dma.vmem_to_smem %s212, 16, [#allocation7], [#allocation6]
        $region16: #{tpu_custom_call.1} parent=11 // pred_fallthru
          _
        // Predicated region
        $region17: #{tpu_custom_call.1} parent=11 // pred_check
          %p215 = pneg %p105
        $region18: #{tpu_custom_call.1} parent=11 // pred_check_branch
          %217 = sbr.rel (%p215) target = $region20
        $region19: #{tpu_custom_call.1} parent=11 // pred_region
          _
        $region20: #{tpu_custom_call.1} parent=11 // pred_fallthru
          _
      $region12: #{tpu_custom_call.1} parent=5 // pred_fallthru
        _
      %p218 = scmp.lt.s32.totalorder %s23, 2
      // Predicated region
      $region21: #{tpu_custom_call.1} parent=5 // pred_check
        %p219 = pneg %p218
      $region22: #{tpu_custom_call.1} parent=5 // pred_check_branch
        %221 = sbr.rel (%p219) target = $region24
      $region23: #{tpu_custom_call.1} parent=5 // pred_region
        // Predicated region
        $region25: #{tpu_custom_call.1} parent=23 // pred_check
          %p222 = pneg %p57
        $region26: #{tpu_custom_call.1} parent=23 // pred_check_branch
          %224 = sbr.rel (%p222) target = $region28
        $region27: #{tpu_custom_call.1} parent=23 // pred_region
          %s225 = sand.u32 %s47, 1
          %s226 = scalar_lea.sflag [#allocation4], %s225
          %s227 = sand.u32 %s47, 1
          %s228 = smul.addr %s227, 8
          %s229 = scalar_lea.vmem [#allocation3], %s228
          %s231 = ssub.s32 128, 128
          %232 = vsyncadd %s226, %s231
          %s233 = smul.addr %s30, 4
          %s234 = sadd.s32 %s31, %s233
          %s235 = smul.addr %s234, 32
          %s236 = scalar_lea.hbm %s0, %s235
          %s237 = sshll.u32 %s229, 4
          %s238 = int_to_ptr.vmem [resolvable:$true] %s237
          %243 = dma.hbm_to_vmem [thread:$0]  %s236, 128, %s238, %s226, 32, 32, 2
        $region28: #{tpu_custom_call.1} parent=23 // pred_fallthru
          _
      $region24: #{tpu_custom_call.1} parent=5 // pred_fallthru
        _
      %p244 = scmp.le.s32.totalorder 1, %s23
      %p245 = scmp.lt.s32.totalorder %s23, 3
      %p246 = pnand %p244, %p245
      %p247 = pneg %p246
      // Predicated region
      $region29: #{tpu_custom_call.1} parent=5 // pred_check
        _
      $region30: #{tpu_custom_call.1} parent=5 // pred_check_branch
        %249 = sbr.rel (%p246) target = $region32
      $region31: #{tpu_custom_call.1} parent=5 // pred_region
        %s250 = ssub.s32 %s23, 1
        %s251 = sand.u32 %s50, 1
        %s252 = scalar_lea.sflag [#allocation4], %s251
        %s253 = sand.u32 %s50, 1
        %s254 = smul.addr %s253, 8
        %s255 = scalar_lea.vmem [#allocation3], %s254
        // Predicated region
        $region33: #{tpu_custom_call.1} parent=31 // pred_check
          %p256 = pneg %p63
        $region34: #{tpu_custom_call.1} parent=31 // pred_check_branch
          %258 = sbr.rel (%p256) target = $region36
        $region35: #{tpu_custom_call.1} parent=31 // pred_region
          %259 = dma.done %s252, 128
        $region36: #{tpu_custom_call.1} parent=31 // pred_fallthru
          _
        // Predicated region
        $region37: #{tpu_custom_call.1} parent=31 // pred_check
          %p260 = pneg %p84
        $region38: #{tpu_custom_call.1} parent=31 // pred_check_branch
          %262 = sbr.rel (%p260) target = $region40
        $region39: #{tpu_custom_call.1} parent=31 // pred_region
          %263 = dma.done [#allocation6], 16
        $region40: #{tpu_custom_call.1} parent=31 // pred_fallthru
          _
        %264 = sfence
        %s265 = sand.u32 %s50, 1
        %s266 = scalar_lea.sflag [#allocation4], %s265
        %s267 = sand.u32 %s50, 1
        %s268 = smul.addr %s267, 8
        %s269 = scalar_lea.vmem [#allocation3], %s268
        %p270 = pneg %p63
        %p271 = pneg %p60
        %p272 = pneg %p84
        %p273 = pneg %p81
        %p274 = pneg %p105
        %p275 = pneg %p102
        %p276 = pneg %p133
        %p277 = pneg %p130
        %s278 = sand.u32 %s120, 1
        %s279 = scalar_lea.sflag [#allocation5], %s278
        %s280 = sand.u32 %s120, 1
        %s281 = smul.addr %s280, 2
        %s282 = scalar_lea.vmem [#allocation8], %s281
        %p283 = pneg %p161
        %p284 = pneg %p158
        %s285 = sand.u32 %s28, 1
        %s286 = scalar_lea.sflag [#allocation10], %s285
        %s287 = sand.u32 %s148, 1
        %s288 = scalar_lea.vmem [#allocation9], %s287
        %p289 = pneg %p189
        %p290 = pneg %p186
        %s291 = sand.u32 %s28, 1
        %s292 = scalar_lea.sflag [#allocation10], %s291
        %s293 = sand.u32 %s176, 1
        %s294 = scalar_lea.vmem [#allocation11], %s293
        %s297 = sld [smem:[#allocation2]]
        %v298 = vld [vmem:[%s255] sm:$0x3]
        %s299 = sld [smem:[#allocation7]]
        %v300 = vstv %s299
        %v301 = vmul.f32 %v298, %v300
        %s302 = scalar_lea.vmem %s255, 2 [#allocation3]
        %v303 = vld [vmem:[%s302] sm:$0x3]
        %s304 = sld [smem:[#allocation7 + $0x1]]
        %v305 = vstv %s304
        %v306 = vmul.f32 %v303, %v305
        %v307 = vadd.f32 %v301, %v306
        %s308 = scalar_lea.vmem %s255, 4 [#allocation3]
        %v309 = vld [vmem:[%s308] sm:$0x3]
        %s310 = sld [smem:[#allocation7 + $0x2]]
        %v311 = vstv %s310
        %v312 = vmul.f32 %v309, %v311
        %v313 = vadd.f32 %v307, %v312
        %s314 = scalar_lea.vmem %s255, 6 [#allocation3]
        %v315 = vld [vmem:[%s314] sm:$0x3]
        %s316 = sld [smem:[#allocation7 + $0x3]]
        %v317 = vstv %s316
        %v318 = vmul.f32 %v315, %v317
        %v319 = vadd.f32 %v313, %v318
        %v320 = vstv %s297
        %v321 = vadd.f32 %v319, %v320
        %v322 = vxor.u32 %v321, 2147483648
        %v323 = vmul.f32 %v322, 1.442695
        %v324 = vpow.pop %v323
        %v325 = vadd.f32 %v324, 1.0
        %v326 = vrcp.pop %v325
        %v327 = vmul.f32 1.0, %v326
        %328 = vst [vmem:[%s282] sm:$0x3] %v327
        %vm329 = vcmp.gt.f32.partialorder %v321, 0.0
        %vm330 = vmpackc.low %vm329, %vm329
        %vm331 = vmpackc.even %vm330, %vm330
        %v332 = vsel %vm331, 16843009, 0
        %vm333 = vcmask 1040384
        %vm334 = vsmask.f32 256
        %vm335 = vmand %vm333, %vm334
        %v336 = vld [vmem:[%s288] sm:$0x1]
        %v337 = vsel %vm335, %v332, %v336
        %338 = vst [vmem:[%s288] sm:$0x1] %v337
        %vm339 = vcmask 1041408
        %v340 = vsel %vm339, %v327, 0.0
        %v341 = vrot.slane %v340, 4
        %v342 = vadd.f32 %v340, %v341
        %v343 = vrot.slane %v342, 2
        %v344 = vadd.f32 %v342, %v343
        %v345 = vrot.slane %v344, 1
        %v346 = vadd.f32 %v344, %v345
        %v347 = vadd.f32 %v346, 0.0
        %348 = vst [vmem:[%s294] sm:$0x1] %v347
        %s349 = sand.u32 %s120, 1
        %s350 = scalar_lea.sflag [#allocation5], %s349
        %s351 = sand.u32 %s120, 1
        %s352 = smul.addr %s351, 2
        %s353 = scalar_lea.vmem [#allocation8], %s352
        %s354 = sand.u32 %s28, 1
        %s355 = scalar_lea.sflag [#allocation10], %s354
        %s356 = sand.u32 %s148, 1
        %s357 = scalar_lea.vmem [#allocation9], %s356
        %s358 = sand.u32 %s28, 1
        %s359 = scalar_lea.sflag [#allocation10], %s358
        %s360 = sand.u32 %s176, 1
        %s361 = scalar_lea.vmem [#allocation11], %s360
        // Predicated region
        $region41: #{tpu_custom_call.1} parent=31 // pred_check
          %p362 = pneg %p130
        $region42: #{tpu_custom_call.1} parent=31 // pred_check_branch
          %364 = sbr.rel (%p362) target = $region44
        $region43: #{tpu_custom_call.1} parent=31 // pred_region
          %s366 = ssub.s32 32, 32
          %367 = vsyncadd %s350, %s366
          %s368 = sadd.s32 %s33, %s32
          %s369 = smul.addr %s368, 32
          %s370 = scalar_lea.hbm %s3, %s369
          %s372 = sshll.u32 %s353, 4
          %s373 = int_to_ptr.vmem [resolvable:$true] %s372
          %375 = dma.vmem_to_hbm [thread:$0]  %s373, 32, %s370, %s350
        $region44: #{tpu_custom_call.1} parent=31 // pred_fallthru
          _
        // Predicated region
        $region45: #{tpu_custom_call.1} parent=31 // pred_check
          %p376 = pneg %p158
        $region46: #{tpu_custom_call.1} parent=31 // pred_check_branch
          %378 = sbr.rel (%p376) target = $region48
        $region47: #{tpu_custom_call.1} parent=31 // pred_region
          %s380 = ssub.s32 16, 16
          %381 = vsyncadd %s355, %s380
          %s382 = sadd.s32 %s33, %s32
          %s383 = smul.addr %s382, 16
          %s384 = scalar_lea.hbm %s4, %s383
          %s386 = sshll.u32 %s357, 4
          %s387 = int_to_ptr.vmem [resolvable:$true] %s386
          %389 = dma.vmem_to_hbm [thread:$0]  %s387, 16, %s384, %s355
        $region48: #{tpu_custom_call.1} parent=31 // pred_fallthru
          _
        // Predicated region
        $region49: #{tpu_custom_call.1} parent=31 // pred_check
          %p390 = pneg %p186
        $region50: #{tpu_custom_call.1} parent=31 // pred_check_branch
          %392 = sbr.rel (%p390) target = $region52
        $region51: #{tpu_custom_call.1} parent=31 // pred_region
          %s394 = ssub.s32 16, 16
          %395 = vsyncadd %s359, %s394
          %s396 = sadd.s32 %s33, %s32
          %s397 = smul.addr %s396, 16
          %s398 = scalar_lea.hbm %s5, %s397
          %s400 = sshll.u32 %s361, 4
          %s401 = int_to_ptr.vmem [resolvable:$true] %s400
          %403 = dma.vmem_to_hbm [thread:$0]  %s401, 16, %s398, %s359
        $region52: #{tpu_custom_call.1} parent=31 // pred_fallthru
          _
      $region32: #{tpu_custom_call.1} parent=5 // pred_fallthru
        _
      %p404 = scmp.le.s32.totalorder 2, %s23
      // Predicated region
      $region53: #{tpu_custom_call.1} parent=5 // pred_check
        %p405 = pneg %p404
      $region54: #{tpu_custom_call.1} parent=5 // pred_check_branch
        %407 = sbr.rel (%p405) target = $region56
      $region55: #{tpu_custom_call.1} parent=5 // pred_region
        %s408 = ssub.s32 %s23, 2
        // Predicated region
        $region57: #{tpu_custom_call.1} parent=55 // pred_check
          %p409 = pneg %p136
        $region58: #{tpu_custom_call.1} parent=55 // pred_check_branch
          %411 = sbr.rel (%p409) target = $region60
        $region59: #{tpu_custom_call.1} parent=55 // pred_region
          %s412 = sand.u32 %s121, 1
          %s413 = scalar_lea.sflag [#allocation5], %s412
          %s414 = sand.u32 %s121, 1
          %s415 = smul.addr %s414, 2
          %s416 = scalar_lea.vmem [#allocation8], %s415
          %417 = dma.done %s413, 32
        $region60: #{tpu_custom_call.1} parent=55 // pred_fallthru
          _
        // Predicated region
        $region61: #{tpu_custom_call.1} parent=55 // pred_check
          %p418 = pneg %p164
        $region62: #{tpu_custom_call.1} parent=55 // pred_check_branch
          %420 = sbr.rel (%p418) target = $region64
        $region63: #{tpu_custom_call.1} parent=55 // pred_region
          %s421 = sand.u32 %s29, 1
          %s422 = scalar_lea.sflag [#allocation10], %s421
          %s423 = sand.u32 %s149, 1
          %s424 = scalar_lea.vmem [#allocation9], %s423
          %425 = dma.done %s422, 16
        $region64: #{tpu_custom_call.1} parent=55 // pred_fallthru
          _
        // Predicated region
        $region65: #{tpu_custom_call.1} parent=55 // pred_check
          %p426 = pneg %p192
        $region66: #{tpu_custom_call.1} parent=55 // pred_check_branch
          %428 = sbr.rel (%p426) target = $region68
        $region67: #{tpu_custom_call.1} parent=55 // pred_region
          %s429 = sand.u32 %s29, 1
          %s430 = scalar_lea.sflag [#allocation10], %s429
          %s431 = sand.u32 %s177, 1
          %s432 = scalar_lea.vmem [#allocation11], %s431
          %433 = dma.done %s430, 16
        $region68: #{tpu_custom_call.1} parent=55 // pred_fallthru
          _
      $region56: #{tpu_custom_call.1} parent=5 // pred_fallthru
        _
    $region6: #{tpu_custom_call.1} parent=1 // loop_footer
      %s27 = sadd.s32 1, %s23
    $region7: #{tpu_custom_call.1} parent=1 // loop_footer_branch
      %22 = sbr.rel target = $region3
    $region8: #{tpu_custom_call.1} parent=1 // loop_exit
      _
    %434 = vsyncpa [#allocation4], 1
    %s435 = scalar_lea.sflag [#allocation4], 1
    %436 = vsyncpa %s435, 1
    %437 = vsyncpa [#allocation5], 1
    %s438 = scalar_lea.sflag [#allocation5], 1
    %439 = vsyncpa %s438, 1
    %440 = vsyncpa [#allocation10], 1
    %s441 = scalar_lea.sflag [#allocation10], 1
    %442 = vsyncpa %s441, 1
    %443 = vsyncpa [#allocation6], 1
    %s444 = scalar_lea.sflag [#allocation6], 1
    %445 = vsyncpa %s444, 1

</llo_original>
